<compile_context>
chip_gen: v5e
topology: v5e:2x2
jax: 0.10.0
libtpu: 0.0.40
codegen_flags: <defaults>
</compile_context>

<pallas_src>
import math
import functools

import jax
import jax.numpy as jnp
from jax.experimental import pallas as pl
from jax.experimental.pallas import tpu as pltpu


NEG_INF = -1e30  # finite large-negative (avoids NaN for fully-masked rows)


def _round_up(x, m):
    return (x + m - 1) // m * m


def _pick_tile(dim, max_tile, align):
    """Pick a block size for `dim`. Returns (tile, padded_dim).

    Prefers tile == dim (full extent, no alignment constraint) or an aligned
    divisor of dim so no padding is required; pads only as a last resort."""
    if dim <= max_tile:
        return dim, dim
    t = (max_tile // align) * align
    while t >= align:
        if dim % t == 0:
            return t, dim
        t -= align
    # TODO(synk): fallback pads ragged dims; only hit for awkward large dims.
    t = (max_tile // align) * align
    return t, _round_up(dim, t)


# ----------------------------------------------------------------------------
# Tiled linear projection kernel:  (M, K) @ (K, N) + (1, N) -> (M, N)
# Operands cast to bf16 per-tile inside the kernel (VPU work hidden under the
# MXU), f32 accumulation in VMEM scratch.
# ----------------------------------------------------------------------------
def _linear_kernel(x_ref, w_ref, b_ref, o_ref, acc_ref):
    @pl.when(pl.program_id(2) == 0)
    def _init():
        acc_ref[...] = jnp.zeros_like(acc_ref)

    acc_ref[...] += jnp.dot(
        x_ref[...].astype(jnp.bfloat16),
        w_ref[...].astype(jnp.bfloat16),
        preferred_element_type=jnp.float32,
    )

    @pl.when(pl.program_id(2) == pl.num_programs(2) - 1)
    def _finalize():
        o_ref[...] = (acc_ref[...] + b_ref[...].astype(jnp.float32)).astype(
            o_ref.dtype)


def pallas_linear(x, w, b, out_dtype=jnp.float32, tm=512, tn=256, tk=512):
    """x: (M, K), w: (K, N), b: (N,) -> (M, N) in out_dtype."""
    M, K = x.shape
    N = w.shape[1]

    tm, Mp = _pick_tile(M, tm, 8)
    tk, Kp = _pick_tile(K, tk, 128)
    tn, Np = _pick_tile(N, tn, 128)

    if (Mp, Kp) != (M, K):
        x = jnp.pad(x, ((0, Mp - M), (0, Kp - K)))
    if (Kp, Np) != (K, N):
        w = jnp.pad(w, ((0, Kp - K), (0, Np - N)))
    bp = b.reshape(1, N)
    if Np != N:
        bp = jnp.pad(bp, ((0, 0), (0, Np - N)))

    out = pl.pallas_call(
        _linear_kernel,
        out_shape=jax.ShapeDtypeStruct((Mp, Np), out_dtype),
        grid=(Mp // tm, Np // tn, Kp // tk),
        in_specs=[
            pl.BlockSpec((tm, tk), lambda i, j, k: (i, k)),
            pl.BlockSpec((tk, tn), lambda i, j, k: (k, j)),
            pl.BlockSpec((1, tn), lambda i, j, k: (0, j)),
        ],
        out_specs=pl.BlockSpec((tm, tn), lambda i, j, k: (i, j)),
        scratch_shapes=[pltpu.VMEM((tm, tn), jnp.float32)],
        compiler_params=pltpu.CompilerParams(
            dimension_semantics=("parallel", "parallel", "arbitrary"),
        ),
    )(x, w, bp)

    if (Mp, Np) != (M, N):
        out = out[:M, :N]
    return out


# ----------------------------------------------------------------------------
# Attention core kernel.  One (batch, q-tile) block per grid step.
#   refs (in order): q_src (1, tq, Fq), kv_src (1, T2, Fkv),
#                    [v_src (1, T2, Fv)], [kp_bias (1, 1, T2)],
#                    [attn_bias (tq, T2)], o (1, tq, F), w (1, tq, T2)
# q/k/v live as column windows (offsets q_off/k_off/v_off) inside the source
# blocks, so the fused (B, T, 3F) QKV buffer is consumed directly.  Heads are
# d_k-wide column slices inside the kernel; per-head contexts are concatenated
# and stored with a single lane-dense (tq, F) write.
# ----------------------------------------------------------------------------
def _attn_kernel(*refs, n_head, d_k, feat, offs, n_src, has_kp, has_am):
    q_off, k_off, v_off = offs
    i = 0
    q_src = refs[i]; i += 1
    kv_src = refs[i]; i += 1
    if n_src == 3:
        v_src = refs[i]; i += 1
    else:
        v_src = kv_src
    kp_ref = None
    am_ref = None
    if has_kp:
        kp_ref = refs[i]; i += 1
    if has_am:
        am_ref = refs[i]; i += 1
    o_ref = refs[i]
    w_ref = refs[i + 1]

    q_all = q_src[0][:, q_off:q_off + feat]      # (tq, F) bf16 (pre-scaled)
    k_all = kv_src[0][:, k_off:k_off + feat]     # (T2, F) bf16
    v_all = v_src[0][:, v_off:v_off + feat]      # (T2, F) bf16

    bias = None
    if has_kp:
        bias = kp_ref[0]                         # (1, T2) f32, row-broadcast
    if has_am:
        am = am_ref[...]                         # (tq, T2) f32
        bias = am if bias is None else bias + am

    ctx_parts = []
    w_sum = None
    for h in range(n_head):                      # n_head is small and static
        lo = h * d_k
        q = q_all[:, lo:lo + d_k]                # (tq, d_k)
        k = k_all[:, lo:lo + d_k]                # (T2, d_k)
        v = v_all[:, lo:lo + d_k]                # (T2, d_k)

        # scores = q @ k^T (contract d_k axes; no explicit transpose)
        s = jax.lax.dot_general(
            q, k, (((1,), (1,)), ((), ())), preferred_element_type=jnp.float32
        )                                        # (tq, T2) f32
        if bias is not None:
            s = s + bias

        m = jnp.max(s, axis=-1, keepdims=True)
        e = jnp.exp(s - m)
        denom = jnp.sum(e, axis=-1, keepdims=True)
        # approx reciprocal (EUP): weights sum to 1 within ~2^-12 rel.
        p = e * pl.reciprocal(denom, approx=True)

        ctx_parts.append(jnp.dot(p.astype(v.dtype), v,
                                 preferred_element_type=jnp.float32))
        w_sum = p if w_sum is None else w_sum + p

    # Single lane-dense (tq, F) store instead of n_head masked d_k-wide stores.
    o_ref[0] = jnp.concatenate(ctx_parts, axis=-1).astype(o_ref.dtype)
    # dropout_rate == 0.0 (eval) -> identity on attention weights.
    w_ref[0] = w_sum * (1.0 / n_head)


def _pick_q_tile(T1, max_tq=256):
    if T1 <= max_tq:
        return T1, T1
    t = (max_tq // 8) * 8
    while t >= 8:
        if T1 % t == 0:
            return t, T1
        t -= 8
    t = (max_tq // 8) * 8
    return t, _round_up(T1, t)


def pallas_attention(q_src, kv_src, v_src, n_head, d_k,
                     q_off, k_off, v_off, kp_bias=None, attn_bias=None):
    """q_src: (B, T1, Fq), kv_src: (B, T2, Fkv), optional v_src: (B, T2, Fv).
    q/k/v are the column windows [off, off + n_head*d_k) of their sources
    (so the fused QKV buffer can be passed for both q_src and kv_src).
    kp_bias: (B, 1, T2) f32 or None; attn_bias: (T1, T2) f32 or None.
    Returns (ctx (B, T1, F) in q_src.dtype, attn weights (B, T1, T2) f32)."""
    B, T1, Fq = q_src.shape
    T2 = kv_src.shape[1]
    Fkv = kv_src.shape[2]
    F = n_head * d_k

    tq, T1p = _pick_q_tile(T1)
    if T1p != T1:
        # TODO(synk): rare ragged fallback; copies the q-row stream once.
        q_src = jnp.pad(q_src, ((0, 0), (0, T1p - T1), (0, 0)))
        if attn_bias is not None:
            attn_bias = jnp.pad(attn_bias, ((0, T1p - T1), (0, 0)))

    args = [q_src, kv_src]
    in_specs = [
        pl.BlockSpec((1, tq, Fq), lambda b, i: (b, i, 0)),
        pl.BlockSpec((1, T2, Fkv), lambda b, i: (b, 0, 0)),
    ]
    n_src = 2
    if v_src is not None:
        args.append(v_src)
        in_specs.append(pl.BlockSpec((1, T2, v_src.shape[2]),
                                     lambda b, i: (b, 0, 0)))
        n_src = 3
    if kp_bias is not None:
        args.append(kp_bias)
        in_specs.append(pl.BlockSpec((1, 1, T2), lambda b, i: (b, 0, 0)))
    if attn_bias is not None:
        args.append(attn_bias)
        in_specs.append(pl.BlockSpec((tq, T2), lambda b, i: (i, 0)))

    kern = functools.partial(
        _attn_kernel, n_head=n_head, d_k=d_k, feat=F,
        offs=(q_off, k_off, v_off), n_src=n_src,
        has_kp=kp_bias is not None, has_am=attn_bias is not None)

    ctx, attn_w = pl.pallas_call(
        kern,
        out_shape=(
            jax.ShapeDtypeStruct((B, T1p, F), q_src.dtype),
            jax.ShapeDtypeStruct((B, T1p, T2), jnp.float32),
        ),
        grid=(B, T1p // tq),
        in_specs=in_specs,
        out_specs=(
            pl.BlockSpec((1, tq, F), lambda b, i: (b, i, 0)),
            pl.BlockSpec((1, tq, T2), lambda b, i: (b, i, 0)),
        ),
        # B (outer) parallel for megacore; inner T1 axis kept on one core so
        # the grid-invariant K/V block stays resident.
        compiler_params=pltpu.CompilerParams(
            dimension_semantics=("parallel", "arbitrary"),
        ),
    )(*args)

    if T1p != T1:
        ctx = ctx[:, :T1, :]
        attn_w = attn_w[:, :T1, :]
    return ctx, attn_w


# ----------------------------------------------------------------------------
# Parameters
# ----------------------------------------------------------------------------
def init_params(key, n_head, n_feat):
    """Deterministic synthetic parameters. Weights stored as (in, out), f32."""
    ks = jax.random.split(key, 8)
    s = 0.02
    return {
        "wq": jax.random.normal(ks[0], (n_feat, n_feat), jnp.float32) * s,
        "bq": jax.random.normal(ks[1], (n_feat,), jnp.float32) * s,
        "wk": jax.random.normal(ks[2], (n_feat, n_feat), jnp.float32) * s,
        "bk": jax.random.normal(ks[3], (n_feat,), jnp.float32) * s,
        "wv": jax.random.normal(ks[4], (n_feat, n_feat), jnp.float32) * s,
        "bv": jax.random.normal(ks[5], (n_feat,), jnp.float32) * s,
        "wo": jax.random.normal(ks[6], (n_feat, n_feat), jnp.float32) * s,
        "bo": jax.random.normal(ks[7], (n_feat,), jnp.float32) * s,
    }


def prepare_params(params, n_head):
    """Fold 1/sqrt(d_k) into Wq/bq, cast weights to bf16 for the MXU (biases
    stay f32), and build fused (F, 3F) QKV / (F, 2F) KV weights so a fused
    projection reads the activation from HBM once."""
    F = params["wq"].shape[0]
    d_k = F // n_head
    scale = 1.0 / math.sqrt(d_k)
    wq = (params["wq"] * scale).astype(jnp.bfloat16)
    bq = (params["bq"] * scale).astype(jnp.float32)
    wk = params["wk"].astype(jnp.bfloat16)
    bk = params["bk"].astype(jnp.float32)
    wv = params["wv"].astype(jnp.bfloat16)
    bv = params["bv"].astype(jnp.float32)
    return {
        "wq": wq, "bq": bq, "wk": wk, "bk": bk, "wv": wv, "bv": bv,
        "wo": params["wo"].astype(jnp.bfloat16),
        "bo": params["bo"].astype(jnp.float32),
        "w_qkv": jnp.concatenate([wq, wk, wv], axis=1),   # (F, 3F)
        "b_qkv": jnp.concatenate([bq, bk, bv], axis=0),   # (3F,)
        "w_kv": jnp.concatenate([wk, wv], axis=1),        # (F, 2F)
        "b_kv": jnp.concatenate([bk, bv], axis=0),        # (2F,)
    }


# ----------------------------------------------------------------------------
# Masks -> small additive biases (never materialized at (B, T1, T2))
# ----------------------------------------------------------------------------
def _make_biases(key_padding_mask, attn_mask, B, T2):
    kp_bias = None
    if key_padding_mask is not None:
        kp_bias = jnp.where(key_padding_mask != 0, NEG_INF, 0.0).astype(
            jnp.float32).reshape(B, 1, T2)
    am_bias = None
    if attn_mask is not None:
        # TODO(synk): 3-D (N*num_heads, L, S) per-head attn_mask unsupported.
        if jnp.issubdtype(attn_mask.dtype, jnp.floating):
            am_bias = attn_mask.astype(jnp.float32)
        else:
            am_bias = jnp.where(attn_mask != 0, NEG_INF, 0.0).astype(jnp.float32)
    return kp_bias, am_bias


# ----------------------------------------------------------------------------
# Full module forward (batch-first, like the wrapper module)
# ----------------------------------------------------------------------------
def mha_forward(prep, query, key, value, n_head,
                attn_mask=None, key_padding_mask=None, self_attention=None):
    """query: (B, L, E), key/value: (B, S, E).
    Returns (output (B, L, E) f32, attn_weights (B, L, S) f32 avg over heads).
    Note: the fused-QKV fast path defaults to Python-identity gating; pass
    self_attention=True explicitly under jit with separate-but-equal arrays."""
    B, T1, F = query.shape
    T2 = key.shape[1]
    d_k = F // n_head

    kp_bias, am_bias = _make_biases(key_padding_mask, attn_mask, B, T2)

    if self_attention is None:
        self_attention = (query is key) and (key is value)

    if self_attention:
        # Fused QKV projection; the (B, T1, 3F) buffer is consumed by the
        # attention kernel directly (no wrapper-side column slices).
        qkv = pallas_linear(query.reshape(B * T1, F), prep["w_qkv"],
                            prep["b_qkv"], out_dtype=jnp.bfloat16)
        qkv = qkv.reshape(B, T1, 3 * F)           # contiguous reshape, free
        ctx, attn_w = pallas_attention(qkv, qkv, None, n_head, d_k,
                                       0, F, 2 * F, kp_bias, am_bias)
    elif key is value:
        q = pallas_linear(query.reshape(B * T1, F), prep["wq"], prep["bq"],
                          out_dtype=jnp.bfloat16).reshape(B, T1, F)
        kv = pallas_linear(key.reshape(B * T2, F), prep["w_kv"], prep["b_kv"],
                           out_dtype=jnp.bfloat16).reshape(B, T2, 2 * F)
        ctx, attn_w = pallas_attention(q, kv, None, n_head, d_k,
                                       0, 0, F, kp_bias, am_bias)
    else:
        q = pallas_linear(query.reshape(B * T1, F), prep["wq"], prep["bq"],
                          out_dtype=jnp.bfloat16).reshape(B, T1, F)
        k = pallas_linear(key.reshape(B * T2, F), prep["wk"], prep["bk"],
                          out_dtype=jnp.bfloat16).reshape(B, T2, F)
        v = pallas_linear(value.reshape(B * T2, F), prep["wv"], prep["bv"],
                          out_dtype=jnp.bfloat16).reshape(B, T2, F)
        ctx, attn_w = pallas_attention(q, k, v, n_head, d_k,
                                       0, 0, 0, kp_bias, am_bias)

    out = pallas_linear(ctx.reshape(B * T1, F), prep["wo"], prep["bo"],
                        out_dtype=jnp.float32).reshape(B, T1, F)
    return out, attn_w


# ----------------------------------------------------------------------------
# Pure-JAX reference (same bf16-operand / f32-accumulate precision policy)
# ----------------------------------------------------------------------------
def mha_reference(prep, query, key, value, n_head,
                  attn_mask=None, key_padding_mask=None):
    B, T1, F = query.shape
    T2 = key.shape[1]
    d_k = F // n_head
    bf = jnp.bfloat16

    def lin(x, w, b):
        return jnp.dot(x.astype(bf), w.astype(bf),
                       preferred_element_type=jnp.float32) + b

    q = lin(query.reshape(B * T1, F), prep["wq"], prep["bq"])
    k = lin(key.reshape(B * T2, F), prep["wk"], prep["bk"])
    v = lin(value.reshape(B * T2, F), prep["wv"], prep["bv"])
    q = q.reshape(B, T1, n_head, d_k).transpose(0, 2, 1, 3).astype(bf)
    k = k.reshape(B, T2, n_head, d_k).transpose(0, 2, 1, 3).astype(bf)
    v = v.reshape(B, T2, n_head, d_k).transpose(0, 2, 1, 3).astype(bf)

    s = jnp.einsum("bhqd,bhkd->bhqk", q, k,
                   preferred_element_type=jnp.float32)        # (B,H,T1,T2)
    if key_padding_mask is not None:
        s = s + jnp.where(key_padding_mask != 0, NEG_INF, 0.0).astype(
            jnp.float32)[:, None, None, :]
    if attn_mask is not None:
        if jnp.issubdtype(attn_mask.dtype, jnp.floating):
            am = attn_mask.astype(jnp.float32)
        else:
            am = jnp.where(attn_mask != 0, NEG_INF, 0.0).astype(jnp.float32)
        s = s + am[None, None, :, :]
    p = jax.nn.softmax(s, axis=-1)
    ctx = jnp.einsum("bhqk,bhkd->bhqd", p.astype(bf), v,
                     preferred_element_type=jnp.float32)
    ctx = ctx.transpose(0, 2, 1, 3).reshape(B * T1, F).astype(bf)
    out = lin(ctx, prep["wo"], prep["bo"]).reshape(B, T1, F)
    attn = jnp.mean(p, axis=1)                                # (B,T1,T2)
    return out, attn


if __name__ == "__main__":
    nhead = 4
    d_model = 32
    B, L, S = 2, 8, 8            # self-attention: L == S

    root = jax.random.PRNGKey(0)
    kparam, kx = jax.random.split(root, 2)

    params = init_params(kparam, nhead, d_model)
    prep = prepare_params(params, nhead)

    x = jax.random.normal(kx, (B, L, d_model), jnp.float32)

    # key_padding_mask (N, S): True = ignore. Batch 1: last two keys padded.
    key_padding_mask = jnp.zeros((B, S), jnp.bool_).at[1, 6:].set(True)

    out, attn = mha_forward(prep, x, x, x, nhead,
                            attn_mask=None, key_padding_mask=key_padding_mask)
    out = jax.block_until_ready(out)
    attn = jax.block_until_ready(attn)

    ref_out, ref_attn = mha_reference(prep, x, x, x, nhead,
                                      attn_mask=None,
                                      key_padding_mask=key_padding_mask)

    assert out.shape == (B, L, d_model)
    assert attn.shape == (B, L, S)
    # Tolerance covers the approx-reciprocal softmax normalization (~2^-12 rel).
    assert jnp.allclose(out, ref_out, atol=2e-3, rtol=2e-2), "output mismatch"
    assert jnp.allclose(attn, ref_attn, atol=2e-3, rtol=2e-2), "attn mismatch"

    print("KERNEL_OK")
</pallas_src>

<mosaic_0001>
module attributes {stable_mosaic.version = 11 : i64} {
  func.func @_linear_kernel(%arg0: i32, %arg1: i32, %arg2: i32, %arg3: memref<16x32xf32, #tpu.memory_space<vmem>>, %arg4: memref<32x96xbf16, #tpu.memory_space<vmem>>, %arg5: memref<1x96xf32, #tpu.memory_space<vmem>>, %arg6: memref<16x96xbf16, #tpu.memory_space<vmem>>, %arg7: memref<16x96xf32, #tpu.memory_space<vmem>>) attributes {dimension_semantics = [#tpu.dimension_semantics<parallel>, #tpu.dimension_semantics<parallel>, #tpu.dimension_semantics<arbitrary>], iteration_bounds = array<i64: 1, 1, 1>, scalar_prefetch = 0 : i64, scratch_operands = 1 : i64, tpu.core_type = #tpu.core_type<tc>, window_params = [{transform_indices = @transform_0, window_bounds = array<i64: 16, 32>}, {transform_indices = @transform_1, window_bounds = array<i64: 32, 96>}, {transform_indices = @transform_2, window_bounds = array<i64: 1, 96>}, {transform_indices = @transform_3, window_bounds = array<i64: 16, 96>}]} {
    %c0_i32 = arith.constant 0 : i32
    %0 = arith.cmpi eq, %arg2, %c0_i32 : i32
    %1 = arith.extui %0 : i1 to i32
    %c0_i32_0 = arith.constant 0 : i32
    %2 = arith.cmpi ne, %1, %c0_i32_0 : i32
    scf.if %2 {
      %cst_10 = arith.constant 0.000000e+00 : f32
      %13 = vector.broadcast %cst_10 : f32 to vector<16x96xf32>
      %c0_11 = arith.constant 0 : index
      %c0_12 = arith.constant 0 : index
      %14 = vector.load %arg7[%c0_11, %c0_12] : memref<16x96xf32, #tpu.memory_space<vmem>>, vector<16x96xf32>
      tpu.vector_store %arg7[%c0_11, %c0_12], %13 {strides = array<i32>} : memref<16x96xf32, #tpu.memory_space<vmem>>, vector<16x96xf32>,
    } else {
    }
    %c0 = arith.constant 0 : index
    %c0_1 = arith.constant 0 : index
    %3 = vector.load %arg7[%c0, %c0_1] : memref<16x96xf32, #tpu.memory_space<vmem>>, vector<16x96xf32>
    %c0_2 = arith.constant 0 : index
    %c0_3 = arith.constant 0 : index
    %4 = vector.load %arg3[%c0_2, %c0_3] : memref<16x32xf32, #tpu.memory_space<vmem>>, vector<16x32xf32>
    %5 = arith.truncf %4 : vector<16x32xf32> to vector<16x32xbf16>
    %c0_4 = arith.constant 0 : index
    %c0_5 = arith.constant 0 : index
    %6 = vector.load %arg4[%c0_4, %c0_5] : memref<32x96xbf16, #tpu.memory_space<vmem>>, vector<32x96xbf16>
    %cst = arith.constant dense<0.000000e+00> : vector<16x96xf32>
    %7 = tpu.matmul %5, %6, %cst {dimension_numbers = #tpu.dot_dimension_numbers<[1], [0], [0], [1], [0, 0, 1, 1], [], []>} : vector<16x32xbf16>, vector<32x96xbf16>, vector<16x96xf32> -> vector<16x96xf32>
    %8 = arith.addf %3, %7 : vector<16x96xf32>
    %c0_6 = arith.constant 0 : index
    %c0_7 = arith.constant 0 : index
    %9 = vector.load %arg7[%c0_6, %c0_7] : memref<16x96xf32, #tpu.memory_space<vmem>>, vector<16x96xf32>
    tpu.vector_store %arg7[%c0_6, %c0_7], %8 {strides = array<i32>} : memref<16x96xf32, #tpu.memory_space<vmem>>, vector<16x96xf32>,
    %c0_i32_8 = arith.constant 0 : i32
    %10 = arith.cmpi eq, %arg2, %c0_i32_8 : i32
    %11 = arith.extui %10 : i1 to i32
    %c0_i32_9 = arith.constant 0 : i32
    %12 = arith.cmpi ne, %11, %c0_i32_9 : i32
    scf.if %12 {
      %c0_10 = arith.constant 0 : index
      %c0_11 = arith.constant 0 : index
      %13 = vector.load %arg7[%c0_10, %c0_11] : memref<16x96xf32, #tpu.memory_space<vmem>>, vector<16x96xf32>
      %c0_12 = arith.constant 0 : index
      %c0_13 = arith.constant 0 : index
      %14 = vector.load %arg5[%c0_12, %c0_13] : memref<1x96xf32, #tpu.memory_space<vmem>>, vector<1x96xf32>
      %15 = vector.broadcast %14 : vector<1x96xf32> to vector<16x96xf32>
      %16 = arith.addf %13, %15 : vector<16x96xf32>
      %17 = arith.truncf %16 : vector<16x96xf32> to vector<16x96xbf16>
      %c0_14 = arith.constant 0 : index
      %c0_15 = arith.constant 0 : index
      %18 = vector.load %arg6[%c0_14, %c0_15] : memref<16x96xbf16, #tpu.memory_space<vmem>>, vector<16x96xbf16>
      tpu.vector_store %arg6[%c0_14, %c0_15], %17 {strides = array<i32>} : memref<16x96xbf16, #tpu.memory_space<vmem>>, vector<16x96xbf16>,
    } else {
    }
    return
  }
  func.func @transform_0(%arg0: i32, %arg1: i32, %arg2: i32) -> (i32, i32) {
    %c0_i32 = arith.constant 0 : i32
    return %arg0, %arg2 : i32, i32
  }
  func.func @transform_1(%arg0: i32, %arg1: i32, %arg2: i32) -> (i32, i32) {
    %c0_i32 = arith.constant 0 : i32
    return %arg2, %arg1 : i32, i32
  }
  func.func @transform_2(%arg0: i32, %arg1: i32, %arg2: i32) -> (i32, i32) {
    %c0_i32 = arith.constant 0 : i32
    %c0_i32_0 = arith.constant 0 : i32
    return %c0_i32, %arg1 : i32, i32
  }
  func.func @transform_3(%arg0: i32, %arg1: i32, %arg2: i32) -> (i32, i32) {
    %c0_i32 = arith.constant 0 : i32
    return %arg0, %arg1 : i32, i32
  }
}

</mosaic_0001>

<llo_original>
// kernel: tpu_custom_call.1
$region0: #{tpu_custom_call.1}
  #allocation0 [shape = 'u32[]', space=smem, size = 0x4, offset = 0x4, fixed_abs, tag = 'smem constant byte address 0x4 - core index']
  #allocation1 [shape = 'u32[72,128]{1,0:T(1,128)}', space=vmem, size = 0x9000, scoped, tag = 'internal scratch']
  #allocation2 [shape = 'f32[16,96]{1,0:T(8,128)}', space=vmem, size = 0x2000, scoped, tag = 'scratch operand']
  %s0 = inlined_call_operand.hbm [shape: f32[16,32], index: 0, kind: input, shape index: {}]
  %s1 = inlined_call_operand.hbm [shape: bf16[32,96], index: 1, kind: input, shape index: {}]
  %s2 = inlined_call_operand.vmem [shape: f32[1,96], index: 2, kind: input, shape index: {}]
  %s3 = inlined_call_operand.hbm [shape: bf16[16,96], index: 3, kind: output, shape index: {}]
  %s4 = sld [smem:[#allocation0]]
  $region38: #{tpu_custom_call.1} parent=0
    _
  %s6 = ssub.s32 1, %s4
  %s7 = scalar_select 0, %s6, %s4
  $region1: #{tpu_custom_call.1} parent=0
    #allocation3 [shape = 'u8[8192]{0}', space=vmem, size = 0x2000, scoped, tag = 'input window, operand 0, single buffered']
    #allocation4 [shape = 's32[1]{0}', space=sflag, size = 0x4, scoped, tag = 'scoped memory for tpu_custom_call.1']
    #allocation5 [shape = 's32[1]{0}', space=sflag, size = 0x4, scoped, tag = 'scoped memory for tpu_custom_call.1']
    #allocation6 [shape = 'u8[8192]{0}', space=vmem, size = 0x2000, scoped, tag = 'input window, operand 1, single buffered']
    #allocation7 [shape = 's32[1]{0}', space=sflag, size = 0x4, scoped, tag = 'scoped memory for tpu_custom_call.1']
    #allocation8 [shape = 'u8[4096]{0}', space=vmem, size = 0x1000, scoped, tag = 'output window, operand 0, single buffered']
    %8 = vsyncpa [#allocation4], 0
    %9 = vsyncpa [#allocation7], 0
    %10 = vsyncpa [#allocation5], 0
    // Predicated region
    $region2: #{tpu_custom_call.1} parent=1 // pred_check
      _
    $region3: #{tpu_custom_call.1} parent=1 // pred_check_branch
      %12 = sbr.rel (0) target = $region5
    $region4: #{tpu_custom_call.1} parent=1 // pred_region
      %14 = vsyncadd [#allocation4], 0
      %s15 = sshll.u32 %s0, 4
      %s16 = int_to_ptr.hbm [resolvable:$true] %s15
      %s17 = sshll.u32 [#allocation3], 4
      %s18 = int_to_ptr.vmem [resolvable:$true] %s17
      %23 = dma.hbm_to_vmem [thread:$0]  %s16, 256, %s18, [#allocation4], 128, 128, 8
    $region5: #{tpu_custom_call.1} parent=1 // pred_fallthru
      _
    // Predicated region
    $region6: #{tpu_custom_call.1} parent=1 // pred_check
      _
    $region7: #{tpu_custom_call.1} parent=1 // pred_check_branch
      %25 = sbr.rel (0) target = $region9
    $region8: #{tpu_custom_call.1} parent=1 // pred_region
      %27 = vsyncadd [#allocation7], 0
      %s28 = sshll.u32 %s1, 4
      %s29 = int_to_ptr.hbm [resolvable:$true] %s28
      %s30 = sshll.u32 [#allocation6], 4
      %s31 = int_to_ptr.vmem [resolvable:$true] %s30
      %36 = dma.hbm_to_vmem [thread:$0]  %s29, 256, %s31, [#allocation7], 64, 64, 4
    $region9: #{tpu_custom_call.1} parent=1 // pred_fallthru
      _
    // Predicated region
    $region10: #{tpu_custom_call.1} parent=1 // pred_check
      _
    $region11: #{tpu_custom_call.1} parent=1 // pred_check_branch
      %38 = sbr.rel (0) target = $region13
    $region12: #{tpu_custom_call.1} parent=1 // pred_region
      _
    $region13: #{tpu_custom_call.1} parent=1 // pred_fallthru
      _
    // Predicated region
    $region14: #{tpu_custom_call.1} parent=1 // pred_check
      _
    $region15: #{tpu_custom_call.1} parent=1 // pred_check_branch
      %40 = sbr.rel (0) target = $region17
    $region16: #{tpu_custom_call.1} parent=1 // pred_region
      %42 = dma.done [#allocation4], 256
    $region17: #{tpu_custom_call.1} parent=1 // pred_fallthru
      _
    // Predicated region
    $region18: #{tpu_custom_call.1} parent=1 // pred_check
      _
    $region19: #{tpu_custom_call.1} parent=1 // pred_check_branch
      %44 = sbr.rel (0) target = $region21
    $region20: #{tpu_custom_call.1} parent=1 // pred_region
      %46 = dma.done [#allocation7], 256
    $region21: #{tpu_custom_call.1} parent=1 // pred_fallthru
      _
    %p48 = scmp.eq.s32.totalorder 0, 0
    // Predicated region
    $region22: #{tpu_custom_call.1} parent=1 // pred_check
      %p49 = pneg %p48
    $region23: #{tpu_custom_call.1} parent=1 // pred_check_branch
      %51 = sbr.rel (%p49) target = $region25
    $region24: #{tpu_custom_call.1} parent=1 // pred_region
      %vm52 = vcmask 785408
      %53 = vst.msk [vmem:[#allocation2] sm:$0xff] %vm52, 0.0
      %54 = vst.msk [vmem:[#allocation2 + $0x8] sm:$0xff] %vm52, 0.0
    $region25: #{tpu_custom_call.1} parent=1 // pred_fallthru
      _
    %v55 = vld [vmem:[#allocation2] sm:$0xff]
    %v56 = vld [vmem:[#allocation2 + $0x8] sm:$0xff]
    %v57 = vld [vmem:[#allocation3] sm:$0xff]
    %v58 = vld [vmem:[#allocation3 + $0x8] sm:$0xff]
    %v59 = vpack.c.bf16 %v58, %v57
    %v60 = vld [vmem:[#allocation6] sm:$0xf]
    %v61 = vld [vmem:[#allocation6 + $0x4] sm:$0xf]
    %v62 = vld [vmem:[#allocation6 + $0x8] sm:$0xf]
    %v63 = vld [vmem:[#allocation6 + $0xc] sm:$0xf]
    %v68 = vunpack.c.l.b16 %v60
    %v69 = vunpack.c.l.b16 %v61
    %v70 = vunpack.c.l.b16 %v62
    %v71 = vunpack.c.l.b16 %v63
    %v72 = vpack.c.b16 %v69, %v68
    %v73 = vpack.c.b16 %v71, %v70
    %vm76 = vcmask 261120
    %v78 = vsel %vm76, %v59, 0
    %80 = vmatpush.bf16.msra.mxu0 0
    %81 = vmatpush.bf16.msra.mxu0 0
    %82 = vmatpush.bf16.msra.mxu0 0
    %83 = vmatpush.bf16.msra.mxu0 0
    %84 = vmatpush.bf16.msra.mxu0 0
    %85 = vmatpush.bf16.msra.mxu0 0
    %86 = vmatpush.bf16.msra.mxu0 %v73
    %87 = vmatpush.bf16.msra.mxu0 %v72
    %88 = vmatmul.bf16.gmra.mxu0 %v78
    %v89 = vpop.f32.mrf.mxu0
    %v90 = vadd.f32 0.0, %v89
    %v91 = vpop.f32.mrf.mxu0
    %v92 = vadd.f32 0.0, %v91
    %93 = vdwg.mxu0
    %v94 = vadd.f32 %v55, %v90
    %v95 = vadd.f32 %v56, %v92
    %vm96 = vcmask 785408
    %97 = vst.msk [vmem:[#allocation2] sm:$0xff] %vm96, %v94
    %98 = vst.msk [vmem:[#allocation2 + $0x8] sm:$0xff] %vm96, %v95
    // Predicated region
    $region26: #{tpu_custom_call.1} parent=1 // pred_check
      %p99 = pneg %p48
    $region27: #{tpu_custom_call.1} parent=1 // pred_check_branch
      %101 = sbr.rel (%p99) target = $region29
    $region28: #{tpu_custom_call.1} parent=1 // pred_region
      %v102 = vld [vmem:[#allocation2] sm:$0xff]
      %v103 = vld [vmem:[#allocation2 + $0x8] sm:$0xff]
      %v104 = vld [vmem:[%s2] sm:$0x1]
      %v106 = vperm.slane %v104, 0
      %v108 = vadd.f32 %v102, %v106
      %v109 = vadd.f32 %v103, %v106
      %v110 = vpack.c.bf16 %v108, %v108
      %v111 = vpack.c.bf16 %v109, %v109
      %vm112 = vcmask 781312
      %113 = vst.msk [vmem:[#allocation8] sm:$0xf] %vm112, %v110
      %114 = vst.msk [vmem:[#allocation8 + $0x4] sm:$0xf] %vm112, %v111
    $region29: #{tpu_custom_call.1} parent=1 // pred_fallthru
      _
    // Predicated region
    $region30: #{tpu_custom_call.1} parent=1 // pred_check
      _
    $region31: #{tpu_custom_call.1} parent=1 // pred_check_branch
      %116 = sbr.rel (0) target = $region33
    $region32: #{tpu_custom_call.1} parent=1 // pred_region
      %118 = vsyncadd [#allocation5], 0
      %s119 = sshll.u32 [#allocation8], 4
      %s120 = int_to_ptr.vmem [resolvable:$true] %s119
      %s121 = sshll.u32 %s3, 4
      %s122 = int_to_ptr.hbm [resolvable:$true] %s121
      %127 = dma.vmem_to_hbm [thread:$0]  %s120, 128, %s122, [#allocation5], 64, 64, 4
    $region33: #{tpu_custom_call.1} parent=1 // pred_fallthru
      _
    // Predicated region
    $region34: #{tpu_custom_call.1} parent=1 // pred_check
      _
    $region35: #{tpu_custom_call.1} parent=1 // pred_check_branch
      %129 = sbr.rel (0) target = $region37
    $region36: #{tpu_custom_call.1} parent=1 // pred_region
      %131 = dma.done [#allocation5], 128
    $region37: #{tpu_custom_call.1} parent=1 // pred_fallthru
      _
    %132 = vsyncpa [#allocation4], 1
    %133 = vsyncpa [#allocation7], 1
    %134 = vsyncpa [#allocation5], 1

</llo_original>
